<compile_context>
chip_gen: v7x
topology: tpu7x:2x2x1
jax: 0.10.0
libtpu: 0.0.40
codegen_flags: <defaults>
</compile_context>

<pallas_src>
import functools

import jax
import jax.numpy as jnp
from jax.experimental import pallas as pl
from jax.experimental.pallas import tpu as pltpu

MARGIN = 2.0
EPS = 1e-6  # F.pairwise_distance default eps


def _contrastive_loss_kernel(o1_ref, o2_ref, lbl_ref, psum_ref, *,
                             margin, n_valid, tile_n):
    # Up-cast after the tile is in VMEM: HBM DMA stays at the native width.
    o1 = o1_ref[...].astype(jnp.float32)                  # (TILE_N, D)
    o2 = o2_ref[...].astype(jnp.float32)                  # (TILE_N, D)
    lbl = lbl_ref[...].astype(jnp.float32)                # (TILE_N, 1)

    # eps added elementwise before the norm (matches torch pairwise_distance).
    diff = o1 - o2 + EPS
    sq = jnp.sum(diff * diff, axis=-1, keepdims=True)     # (TILE_N, 1) == d**2
    d = jnp.sqrt(sq)

    pos = (1.0 - lbl) * sq                                 # sq == d*d, skip re-square
    neg = lbl * jnp.square(jnp.maximum(margin - d, 0.0))
    contrib = pos + neg                                    # (TILE_N, 1)

    # Zero the padded rows of a ragged last tile so the final mean is exact.
    row0 = pl.program_id(0) * tile_n
    rows = row0 + jax.lax.broadcasted_iota(jnp.int32, (tile_n, 1), 0)
    contrib = jnp.where(rows < n_valid, contrib, 0.0)

    psum_ref[...] = jnp.sum(contrib).reshape(1, 1, 1)


def _pick_tile_n(n, d, itemsize):
    """Rows per tile: 2 inputs x 2 pipeline buffers <= ~8 MiB (v5e/v6e/v7x safe)."""
    budget = 8 * 1024 * 1024
    per_row = max(2 * 2 * d * itemsize, 1)
    tn = budget // per_row
    tn = max(8, (min(tn, 1024) // 8) * 8)      # multiple of 8 (f32 sublane)
    n_pad8 = -(-n // 8) * 8
    return min(tn, n_pad8)


def contrastive_loss(output1, output2, label, margin=MARGIN):
    """output1, output2: (N, D); label: (N,). Returns scalar f32 loss."""
    n, d = output1.shape
    itemsize = jnp.dtype(output1.dtype).itemsize
    tile_n = _pick_tile_n(n, d, itemsize)
    num_tiles = -(-n // tile_n)
    n_pad = num_tiles * tile_n

    if n_pad != n:
        output1 = jnp.pad(output1, ((0, n_pad - n), (0, 0)))
        output2 = jnp.pad(output2, ((0, n_pad - n), (0, 0)))
        label = jnp.pad(label, (0, n_pad - n))

    label2d = label.reshape(n_pad, 1).astype(jnp.float32)

    kernel = functools.partial(
        _contrastive_loss_kernel, margin=float(margin), n_valid=n, tile_n=tile_n)

    partial_sums = pl.pallas_call(
        kernel,
        out_shape=jax.ShapeDtypeStruct((num_tiles, 1, 1), jnp.float32),
        grid=(num_tiles,),
        in_specs=[
            pl.BlockSpec((tile_n, d), lambda i: (i, 0)),
            pl.BlockSpec((tile_n, d), lambda i: (i, 0)),
            pl.BlockSpec((tile_n, 1), lambda i: (i, 0)),
        ],
        out_specs=pl.BlockSpec((1, 1, 1), lambda i: (i, 0, 0)),
        compiler_params=pltpu.CompilerParams(
            dimension_semantics=("parallel",)),
        cost_estimate=pl.CostEstimate(
            flops=5 * n_pad * d + 8 * n_pad,
            transcendentals=n_pad,
            bytes_accessed=2 * n_pad * d * itemsize + n_pad * 4 + num_tiles * 4),
    )(output1, output2, label2d)

    # Tiny final reduction over the per-tile partial sums; divide by true N.
    return jnp.sum(partial_sums) / n


def _reference(output1, output2, label, margin=MARGIN):
    diff = output1.astype(jnp.float32) - output2.astype(jnp.float32) + EPS
    dist = jnp.sqrt(jnp.sum(diff * diff, axis=-1))
    return jnp.mean((1.0 - label) * dist**2
                    + label * jnp.clip(margin - dist, 0.0, None) ** 2)


if __name__ == "__main__":
    key = jax.random.PRNGKey(0)
    k1, k2, k3, k4, k5, k6 = jax.random.split(key, 6)

    # Primary check: shapes consistent with the module's forward (batch, hidden).
    N, D = 8, 32
    output1 = jax.random.normal(k1, (N, D), dtype=jnp.float32)
    output2 = jax.random.normal(k2, (N, D), dtype=jnp.float32)
    label = jax.random.bernoulli(k3, 0.5, (N,)).astype(jnp.float32)

    loss = contrastive_loss(output1, output2, label)
    jax.block_until_ready(loss)
    ref = _reference(output1, output2, label)
    assert jnp.allclose(loss, ref, rtol=1e-5, atol=1e-5), (loss, ref)

    # Ragged-batch check (N not a multiple of 8) exercises the row-mask path.
    N2, D2 = 13, 32
    a = jax.random.normal(k4, (N2, D2), dtype=jnp.float32)
    b = jax.random.normal(k5, (N2, D2), dtype=jnp.float32)
    lbl2 = jax.random.bernoulli(k6, 0.5, (N2,)).astype(jnp.float32)

    loss2 = contrastive_loss(a, b, lbl2)
    jax.block_until_ready(loss2)
    ref2 = _reference(a, b, lbl2)
    assert jnp.allclose(loss2, ref2, rtol=1e-5, atol=1e-5), (loss2, ref2)

    print("KERNEL_OK")
</pallas_src>

<mosaic_0001>
module attributes {stable_mosaic.version = 11 : i64} {
  func.func @_contrastive_loss_kernel(%arg0: i32, %arg1: memref<8x32xf32, #tpu.memory_space<vmem>>, %arg2: memref<8x32xf32, #tpu.memory_space<vmem>>, %arg3: memref<8x1xf32, #tpu.memory_space<vmem>>, %arg4: memref<1x1x1xf32, #tpu.memory_space<vmem>>) attributes {dimension_semantics = [#tpu.dimension_semantics<parallel>], iteration_bounds = array<i64: 1>, scalar_prefetch = 0 : i64, scratch_operands = 0 : i64, tpu.core_type = #tpu.core_type<tc>, window_params = [{transform_indices = @transform_0, window_bounds = array<i64: 8, 32>}, {transform_indices = @transform_1, window_bounds = array<i64: 8, 32>}, {transform_indices = @transform_2, window_bounds = array<i64: 8, 1>}, {transform_indices = @transform_3, window_bounds = array<i64: 1, 1, 1>}]} {
    %c0 = arith.constant 0 : index
    %c0_0 = arith.constant 0 : index
    %0 = vector.load %arg1[%c0, %c0_0] : memref<8x32xf32, #tpu.memory_space<vmem>>, vector<8x32xf32>
    %c0_1 = arith.constant 0 : index
    %c0_2 = arith.constant 0 : index
    %1 = vector.load %arg2[%c0_1, %c0_2] : memref<8x32xf32, #tpu.memory_space<vmem>>, vector<8x32xf32>
    %c0_3 = arith.constant 0 : index
    %c0_4 = arith.constant 0 : index
    %2 = vector.load %arg3[%c0_3, %c0_4] : memref<8x1xf32, #tpu.memory_space<vmem>>, vector<8x1xf32>
    %3 = arith.subf %0, %1 : vector<8x32xf32>
    %cst = arith.constant 9.99999997E-7 : f32
    %4 = vector.broadcast %cst : f32 to vector<8x32xf32>
    %5 = arith.addf %3, %4 : vector<8x32xf32>
    %6 = arith.mulf %5, %5 : vector<8x32xf32>
    %cst_5 = arith.constant dense<0.000000e+00> : vector<8xf32>
    %7 = vector.multi_reduction <add>, %6, %cst_5 [1] : vector<8x32xf32> to vector<8xf32>
    %8 = vector.shape_cast %7 : vector<8xf32> to vector<8x1xf32>
    %9 = math.sqrt %8 : vector<8x1xf32>
    %cst_6 = arith.constant 1.000000e+00 : f32
    %10 = vector.broadcast %cst_6 : f32 to vector<8x1xf32>
    %11 = arith.subf %10, %2 : vector<8x1xf32>
    %12 = arith.mulf %11, %8 : vector<8x1xf32>
    %cst_7 = arith.constant 2.000000e+00 : f32
    %13 = vector.broadcast %cst_7 : f32 to vector<8x1xf32>
    %14 = arith.subf %13, %9 : vector<8x1xf32>
    %cst_8 = arith.constant 0.000000e+00 : f32
    %15 = vector.broadcast %cst_8 : f32 to vector<8x1xf32>
    %16 = arith.maximumf %14, %15 : vector<8x1xf32>
    %17 = arith.mulf %16, %16 : vector<8x1xf32>
    %18 = arith.mulf %2, %17 : vector<8x1xf32>
    %19 = arith.addf %12, %18 : vector<8x1xf32>
    %c8_i32 = arith.constant 8 : i32
    %20 = arith.muli %arg0, %c8_i32 : i32
    %21 = tpu.iota {dimensions = array<i32: 0>} : vector<8x1xi32>
    %22 = vector.broadcast %20 : i32 to vector<8x1xi32>
    %23 = arith.addi %22, %21 : vector<8x1xi32>
    %c8_i32_9 = arith.constant 8 : i32
    %24 = vector.broadcast %c8_i32_9 : i32 to vector<8x1xi32>
    %25 = arith.cmpi slt, %23, %24 : vector<8x1xi32>
    %cst_10 = arith.constant 0.000000e+00 : f32
    %26 = vector.broadcast %cst_10 : f32 to vector<8x1xf32>
    %27 = arith.select %25, %19, %26 : vector<8x1xi1>, vector<8x1xf32>
    %28 = vector.shape_cast %27 : vector<8x1xf32> to vector<1x8x1xf32>
    %cst_11 = arith.constant dense<0.000000e+00> : vector<1xf32>
    %29 = vector.multi_reduction <add>, %28, %cst_11 [1, 2] : vector<1x8x1xf32> to vector<1xf32>
    %30 = vector.shape_cast %29 : vector<1xf32> to vector<1x1x1xf32>
    %31 = vector.extract %30[0, 0, 0] : f32 from vector<1x1x1xf32>
    %32 = vector.broadcast %31 : f32 to vector<1x1x1xf32>
    %c0_12 = arith.constant 0 : index
    %c0_13 = arith.constant 0 : index
    %c0_14 = arith.constant 0 : index
    %33 = vector.load %arg4[%c0_12, %c0_13, %c0_14] : memref<1x1x1xf32, #tpu.memory_space<vmem>>, vector<1x1x1xf32>
    tpu.vector_store %arg4[%c0_12, %c0_13, %c0_14], %32 {strides = array<i32>} : memref<1x1x1xf32, #tpu.memory_space<vmem>>, vector<1x1x1xf32>,
    return
  }
  func.func @transform_0(%arg0: i32) -> (i32, i32) {
    %c0_i32 = arith.constant 0 : i32
    %c0_i32_0 = arith.constant 0 : i32
    return %arg0, %c0_i32 : i32, i32
  }
  func.func @transform_1(%arg0: i32) -> (i32, i32) {
    %c0_i32 = arith.constant 0 : i32
    %c0_i32_0 = arith.constant 0 : i32
    return %arg0, %c0_i32 : i32, i32
  }
  func.func @transform_2(%arg0: i32) -> (i32, i32) {
    %c0_i32 = arith.constant 0 : i32
    %c0_i32_0 = arith.constant 0 : i32
    return %arg0, %c0_i32 : i32, i32
  }
  func.func @transform_3(%arg0: i32) -> (i32, i32, i32) {
    %c0_i32 = arith.constant 0 : i32
    %c0_i32_0 = arith.constant 0 : i32
    %c0_i32_1 = arith.constant 0 : i32
    return %arg0, %c0_i32, %c0_i32_0 : i32, i32, i32
  }
}

</mosaic_0001>

<llo_original>
// kernel: tpu_custom_call.1
$region0: #{tpu_custom_call.1}
  #allocation0 [shape = 'u32[]', space=smem, size = 0x4, offset = 0x4, fixed_abs, tag = 'smem constant byte address 0x4 - core index']
  #allocation1 [shape = 'u32[144,128]{1,0:T(1,128)}', space=vmem, size = 0x12000, scoped, tag = 'internal scratch']
  %s0 = inlined_call_operand.vmem [shape: f32[8,32], index: 0, kind: input, shape index: {}]
  %s1 = inlined_call_operand.hbm [shape: f32[8,32], index: 1, kind: input, shape index: {}]
  %s2 = inlined_call_operand.vmem [shape: f32[8,1], index: 2, kind: input, shape index: {}]
  %s3 = inlined_call_operand.hbm [shape: f32[1,1,1], index: 3, kind: output, shape index: {}]
  %s4 = sld [smem:[#allocation0]]
  $region26: #{tpu_custom_call.1} parent=0
    _
  %s6 = ssub.s32 1, %s4
  %s7 = scalar_select 0, %s6, %s4
  $region1: #{tpu_custom_call.1} parent=0
    #allocation2 [shape = 'u8[4096]{0}', space=vmem, size = 0x1000, scoped, tag = 'input window, operand 1, single buffered']
    #allocation3 [shape = 's32[1]{0}', space=sflag, size = 0x4, scoped, tag = 'scoped memory for tpu_custom_call.1']
    #allocation4 [shape = 's32[1]{0}', space=sflag, size = 0x4, scoped, tag = 'scoped memory for tpu_custom_call.1']
    #allocation5 [shape = 'u8[512]{0}', space=vmem, size = 0x400, scoped, tag = 'output window, operand 0, single buffered']
    %8 = vsyncpa [#allocation3], 0
    %9 = vsyncpa [#allocation4], 0
    // Predicated region
    $region2: #{tpu_custom_call.1} parent=1 // pred_check
      _
    $region3: #{tpu_custom_call.1} parent=1 // pred_check_branch
      %11 = sbr.rel (0) target = $region5
    $region4: #{tpu_custom_call.1} parent=1 // pred_region
      _
    $region5: #{tpu_custom_call.1} parent=1 // pred_fallthru
      _
    // Predicated region
    $region6: #{tpu_custom_call.1} parent=1 // pred_check
      _
    $region7: #{tpu_custom_call.1} parent=1 // pred_check_branch
      %13 = sbr.rel (0) target = $region9
    $region8: #{tpu_custom_call.1} parent=1 // pred_region
      %s15 = ssub.s32 128, 128
      %16 = vsyncadd [#allocation3], %s15
      %s18 = sshll.u32 [#allocation2], 4
      %s19 = int_to_ptr.vmem [resolvable:$true] %s18
      %21 = dma.hbm_to_vmem [thread:$0]  %s1, 128, %s19, [#allocation3]
    $region9: #{tpu_custom_call.1} parent=1 // pred_fallthru
      _
    // Predicated region
    $region10: #{tpu_custom_call.1} parent=1 // pred_check
      _
    $region11: #{tpu_custom_call.1} parent=1 // pred_check_branch
      %23 = sbr.rel (0) target = $region13
    $region12: #{tpu_custom_call.1} parent=1 // pred_region
      _
    $region13: #{tpu_custom_call.1} parent=1 // pred_fallthru
      _
    // Predicated region
    $region14: #{tpu_custom_call.1} parent=1 // pred_check
      _
    $region15: #{tpu_custom_call.1} parent=1 // pred_check_branch
      %25 = sbr.rel (0) target = $region17
    $region16: #{tpu_custom_call.1} parent=1 // pred_region
      %26 = dma.done [#allocation3], 128
    $region17: #{tpu_custom_call.1} parent=1 // pred_fallthru
      _
    %v27 = vld [vmem:[%s0] sm:$0xff]
    %v28 = vld [vmem:[#allocation2] sm:$0xff]
    %v29 = vld [vmem:[%s2] sm:$0xff]
    %v30 = vsub.f32 %v27, %v28
    %v31 = vadd.f32 %v30, 1e-06
    %v32 = vmul.f32 %v31, %v31
    %vm33 = vcmask 261120
    %v34 = vsel %vm33, %v32, 0.0
    %35 = vadd.xlane.f32.xlu0 %v34
    %v36 = vpop.xlane.xlu0 %35
    %v37 = vrsqrt.pop %v36
    %v38 = vmul.f32 %v36, %v37
    %vm39 = vcmp.eq.f32.partialorder %v36, inf
    %v40 = vsel %vm39, %v36, %v38
    %vm41 = vcmp.eq.f32.partialorder %v36, 0.0
    %v42 = vand.u32 %v36, 2147483648
    %v43 = vsel %vm41, %v42, %v40
    %v44 = vsub.f32 1.0, %v29
    %v45 = vmul.f32 %v44, %v36
    %v46 = vsub.f32 2.0, %v43
    %v47 = vmax.f32 %v46, 0.0
    %v48 = vmul.f32 %v47, %v47
    %v49 = vmul.f32 %v29, %v48
    %v50 = vadd.f32 %v45, %v49
    %s51 = smul.u32 0, 8
    %v52 = vlaneseq
    %v53 = vshrl.u32 %v52, 7
    %v54 = vstv %s51
    %v55 = vadd.s32 %v54, %v53
    %vm56 = vcmp.lt.s32.totalorder %v55, 8
    %v57 = vsel %vm56, %v50, 0.0
    %vm58 = vcmask 7168
    %v59 = vsel %vm58, %v57, 0.0
    %60 = vadd.xlane.f32.xlu0 %v59
    %v61 = vpop.xlane.xlu0 %60
    %v62 = vrot.slane %v61, 4
    %v63 = vadd.f32 %v61, %v62
    %v64 = vrot.slane %v63, 2
    %v65 = vadd.f32 %v63, %v64
    %v66 = vrot.slane %v65, 1
    %v67 = vadd.f32 %v65, %v66
    %s68 = vtos %v67
    %v69 = vstv %s68
    %vm70 = vcmask 0
    %71 = vst.msk [vmem:[#allocation5] sm:$0x1] %vm70, %v69
    // Predicated region
    $region18: #{tpu_custom_call.1} parent=1 // pred_check
      _
    $region19: #{tpu_custom_call.1} parent=1 // pred_check_branch
      %73 = sbr.rel (0) target = $region21
    $region20: #{tpu_custom_call.1} parent=1 // pred_region
      %s75 = ssub.s32 16, 16
      %76 = vsyncadd [#allocation4], %s75
      %s78 = sshll.u32 [#allocation5], 4
      %s79 = int_to_ptr.vmem [resolvable:$true] %s78
      %81 = dma.vmem_to_hbm [thread:$0]  %s79, 16, %s3, [#allocation4]
    $region21: #{tpu_custom_call.1} parent=1 // pred_fallthru
      _
    // Predicated region
    $region22: #{tpu_custom_call.1} parent=1 // pred_check
      _
    $region23: #{tpu_custom_call.1} parent=1 // pred_check_branch
      %83 = sbr.rel (0) target = $region25
    $region24: #{tpu_custom_call.1} parent=1 // pred_region
      %84 = dma.done [#allocation4], 16
    $region25: #{tpu_custom_call.1} parent=1 // pred_fallthru
      _
    %85 = vsyncpa [#allocation3], 1
    %86 = vsyncpa [#allocation4], 1

</llo_original>
